<compile_context>
chip_gen: v6e
topology: v6e:2x2x1
jax: 0.10.0
libtpu: 0.0.40
codegen_flags: <defaults>
</compile_context>

<pallas_src>
import jax
import jax.numpy as jnp
from jax.experimental import pallas as pl
from jax.experimental.pallas import tpu as pltpu


def _round_up(x, m):
    return ((x + m - 1) // m) * m


def _gated_attn_v_kernel(x_ref, w_ref, b_ref, o_ref):
    # x_ref: (block_n, K_pad)  compute dtype (bf16 by default) -> MXU
    # w_ref: (K_pad,  A_pad)   compute dtype, resident across the grid
    # b_ref: (1,      A_pad)   f32
    # o_ref: (block_n, A_pad)  f32, lane-dense store (A_pad % 128 == 0)
    z = jnp.dot(x_ref[...], w_ref[...], preferred_element_type=jnp.float32)
    o_ref[...] = jnp.tanh(z + b_ref[...])  # bias + tanh epilogue in f32


def gated_attention_v_forward(features, W_V, b_V, *, block_n=256,
                              compute_dtype=jnp.bfloat16):
    """tanh(features @ W_V.T + b_V).

    features: (N, dim) float; W_V: (att_dim, dim) torch nn.Linear layout;
    b_V: (att_dim,). Returns (N, att_dim) float32.
    """
    N, dim = features.shape
    A, dim_w = W_V.shape
    assert dim == dim_w, "W_V must be (out_features, in_features)"

    # Lane-align K (contraction) and A (output) axes; pad batch to block_n.
    K_pad = _round_up(dim, 128)
    A_pad = _round_up(A, 128)
    block_n = max(8, min(block_n, _round_up(N, 128)))
    N_pad = _round_up(N, block_n)

    x_p = jnp.zeros((N_pad, K_pad), compute_dtype)
    x_p = x_p.at[:N, :dim].set(features.astype(compute_dtype))
    w_p = jnp.zeros((K_pad, A_pad), compute_dtype)
    w_p = w_p.at[:dim, :A].set(W_V.T.astype(compute_dtype))
    b_p = jnp.zeros((1, A_pad), jnp.float32)
    b_p = b_p.at[0, :A].set(b_V.astype(jnp.float32))

    grid = (N_pad // block_n,)

    out = pl.pallas_call(
        _gated_attn_v_kernel,
        out_shape=jax.ShapeDtypeStruct((N_pad, A_pad), jnp.float32),
        grid_spec=pltpu.PrefetchScalarGridSpec(
            num_scalar_prefetch=0,
            grid=grid,
            in_specs=[
                pl.BlockSpec((block_n, K_pad), lambda i: (i, 0)),  # x row tile
                pl.BlockSpec((K_pad, A_pad), lambda i: (0, 0)),    # W (resident)
                pl.BlockSpec((1, A_pad), lambda i: (0, 0)),        # bias (resident)
            ],
            out_specs=pl.BlockSpec((block_n, A_pad), lambda i: (i, 0)),
        ),
        compiler_params=pltpu.CompilerParams(
            dimension_semantics=("parallel",),  # megacore split of batch on v7x
        ),
    )(x_p, w_p, b_p)

    return out[:N, :A]


if __name__ == "__main__":
    # GatedAttentionLayerV default dim=512; typical ABMIL attention width 128.
    N, dim, att_dim = 512, 512, 128

    key = jax.random.PRNGKey(0)
    kx, kw, kb = jax.random.split(key, 3)
    features = jax.random.normal(kx, (N, dim), jnp.float32)
    s = 1.0 / jnp.sqrt(dim)
    W_V = jax.random.uniform(kw, (att_dim, dim), jnp.float32, -s, s)
    b_V = jax.random.uniform(kb, (att_dim,), jnp.float32, -s, s)

    out = gated_attention_v_forward(features, W_V, b_V)
    out = jax.block_until_ready(out)

    # Pure-JAX reference with the same bf16-rounded MXU inputs, f32 accumulate.
    xq = features.astype(jnp.bfloat16).astype(jnp.float32)
    wq = W_V.astype(jnp.bfloat16).astype(jnp.float32)
    ref = jnp.tanh(
        jnp.dot(xq, wq.T, precision=jax.lax.Precision.HIGHEST) + b_V[None, :]
    )

    assert out.shape == (N, att_dim)
    assert jnp.allclose(out, ref, atol=1e-2, rtol=1e-2)

    print("KERNEL_OK")
</pallas_src>

<mosaic_0001>
module attributes {stable_mosaic.version = 11 : i64} {
  func.func @_gated_attn_v_kernel(%arg0: i32, %arg1: memref<256x512xbf16, #tpu.memory_space<vmem>>, %arg2: memref<512x128xbf16, #tpu.memory_space<vmem>>, %arg3: memref<1x128xf32, #tpu.memory_space<vmem>>, %arg4: memref<256x128xf32, #tpu.memory_space<vmem>>) attributes {dimension_semantics = [#tpu.dimension_semantics<parallel>], iteration_bounds = array<i64: 2>, scalar_prefetch = 0 : i64, scratch_operands = 0 : i64, tpu.core_type = #tpu.core_type<tc>, window_params = [{transform_indices = @transform_0, window_bounds = array<i64: 256, 512>}, {pipeline_mode = #tpu.pipeline_mode<synchronous>, transform_indices = @transform_1, window_bounds = array<i64: 512, 128>}, {pipeline_mode = #tpu.pipeline_mode<synchronous>, transform_indices = @transform_2, window_bounds = array<i64: 1, 128>}, {transform_indices = @transform_3, window_bounds = array<i64: 256, 128>}]} {
    %c0 = arith.constant 0 : index
    %c0_0 = arith.constant 0 : index
    %0 = vector.load %arg1[%c0, %c0_0] : memref<256x512xbf16, #tpu.memory_space<vmem>>, vector<256x512xbf16>
    %c0_1 = arith.constant 0 : index
    %c0_2 = arith.constant 0 : index
    %1 = vector.load %arg2[%c0_1, %c0_2] : memref<512x128xbf16, #tpu.memory_space<vmem>>, vector<512x128xbf16>
    %cst = arith.constant dense<0.000000e+00> : vector<256x128xf32>
    %2 = tpu.matmul %0, %1, %cst {dimension_numbers = #tpu.dot_dimension_numbers<[1], [0], [0], [1], [0, 0, 1, 1], [], []>} : vector<256x512xbf16>, vector<512x128xbf16>, vector<256x128xf32> -> vector<256x128xf32>
    %c0_3 = arith.constant 0 : index
    %c0_4 = arith.constant 0 : index
    %3 = vector.load %arg3[%c0_3, %c0_4] : memref<1x128xf32, #tpu.memory_space<vmem>>, vector<1x128xf32>
    %4 = vector.broadcast %3 : vector<1x128xf32> to vector<256x128xf32>
    %5 = arith.addf %2, %4 : vector<256x128xf32>
    %6 = math.tanh %5 : vector<256x128xf32>
    %c0_5 = arith.constant 0 : index
    %c0_6 = arith.constant 0 : index
    %7 = vector.load %arg4[%c0_5, %c0_6] : memref<256x128xf32, #tpu.memory_space<vmem>>, vector<256x128xf32>
    tpu.vector_store %arg4[%c0_5, %c0_6], %6 {strides = array<i32>} : memref<256x128xf32, #tpu.memory_space<vmem>>, vector<256x128xf32>,
    return
  }
  func.func @transform_0(%arg0: i32) -> (i32, i32) {
    %c0_i32 = arith.constant 0 : i32
    %c0_i32_0 = arith.constant 0 : i32
    return %arg0, %c0_i32 : i32, i32
  }
  func.func @transform_1(%arg0: i32) -> (i32, i32) {
    %c0_i32 = arith.constant 0 : i32
    %c0_i32_0 = arith.constant 0 : i32
    %c0_i32_1 = arith.constant 0 : i32
    return %c0_i32, %c0_i32_0 : i32, i32
  }
  func.func @transform_2(%arg0: i32) -> (i32, i32) {
    %c0_i32 = arith.constant 0 : i32
    %c0_i32_0 = arith.constant 0 : i32
    %c0_i32_1 = arith.constant 0 : i32
    return %c0_i32, %c0_i32_0 : i32, i32
  }
  func.func @transform_3(%arg0: i32) -> (i32, i32) {
    %c0_i32 = arith.constant 0 : i32
    %c0_i32_0 = arith.constant 0 : i32
    return %arg0, %c0_i32 : i32, i32
  }
}

</mosaic_0001>

<llo_original>
// kernel: tpu_custom_call.1
$region0: #{tpu_custom_call.1}
  #allocation0 [shape = 'u32[]', space=smem, size = 0x4, offset = 0x4, fixed_abs, tag = 'smem constant byte address 0x4 - core index']
  #allocation1 [shape = 'u32[144,128]{1,0:T(1,128)}', space=vmem, size = 0x12000, scoped, tag = 'internal scratch']
  %s0 = inlined_call_operand.hbm [shape: bf16[512,512], index: 0, kind: input, shape index: {}]
  %s1 = inlined_call_operand.hbm [shape: bf16[512,128], index: 1, kind: input, shape index: {}]
  %s2 = inlined_call_operand.vmem [shape: f32[1,128], index: 2, kind: input, shape index: {}]
  %s3 = inlined_call_operand.hbm [shape: f32[512,128], index: 3, kind: output, shape index: {}]
  %s4 = sld [smem:[#allocation0]]
  $region53: #{tpu_custom_call.1} parent=0
    _
  %s6 = ssub.s32 1, %s4
  %s7 = scalar_select 0, %s6, %s4
  $region1: #{tpu_custom_call.1} parent=0
    #allocation2 [shape = 'u8[524288]{0}', space=vmem, size = 0x80000, scoped, tag = 'input window, operand 0']
    #allocation3 [shape = 's32[2]{0}', space=sflag, size = 0x8, scoped, tag = 'scoped memory for tpu_custom_call.1']
    #allocation4 [shape = 's32[2]{0}', space=sflag, size = 0x8, scoped, tag = 'scoped memory for tpu_custom_call.1']
    #allocation5 [shape = 'u8[131072]{0}', space=vmem, size = 0x20000, scoped, tag = 'input window, operand 1, single buffered']
    #allocation6 [shape = 's32[1]{0}', space=sflag, size = 0x4, scoped, tag = 'scoped memory for tpu_custom_call.1']
    #allocation7 [shape = 'u8[262144]{0}', space=vmem, size = 0x40000, scoped, tag = 'output window, operand 0']
    %8 = vsyncpa [#allocation3], 0
    %s9 = scalar_lea.sflag [#allocation3], 1
    %10 = vsyncpa %s9, 0
    %11 = vsyncpa [#allocation6], 0
    %12 = vsyncpa [#allocation4], 0
    %s13 = scalar_lea.sflag [#allocation4], 1
    %14 = vsyncpa %s13, 0
    loop: start=0, step=1, limit=4
    $region2: #{tpu_custom_call.1} parent=1 // loop_pre_header
      _
    $region3: #{tpu_custom_call.1} parent=1 // loop_header
      %s16 = sphi 0, %s20
      %p17 = scmp.ge.s32.totalorder %s16, 4
      %s26 = sphi 0, %s28
      %s29 = sphi 0, %s26
      %s30 = sphi 0, %s29
      %s46 = sphi 0, %s30
      %s50 = sphi 0, %s50
      %s52 = sphi 0, %s50
      %s53 = sphi 0, %s52
      %s67 = sphi 0, %s53
      %s71 = sphi 0, %s71
      %s73 = sphi 0, %s71
      %s74 = sphi 0, %s73
      %s88 = sphi 0, %s74
      %s94 = sphi 0, %s96
      %s97 = sphi 0, %s94
      %s98 = sphi 0, %s97
      %s114 = sphi 0, %s98
    $region4: #{tpu_custom_call.1} parent=1 // loop_header_branch
      %19 = sbr.rel (%p17) target = $region8
    $region5: #{tpu_custom_call.1} parent=1 // loop_body
      %s21 = ssub.s32 %s16, 1
      %s22 = ssub.s32 %s16, 2
      %s23 = sadd.s32 %s16, 1
      %s24 = ssub.s32 %s16, %s23
      %p25 = scmp.eq.s32.totalorder %s24, 0
      %s27 = sadd.s32 %s26, 1
      %s28 = scalar_select %p25, %s26, %s27
      %p31 = pneg %p25
      %p32 = scmp.eq.s32.totalorder %s16, 1
      %p33 = por %p31, %p32
      %p34 = scmp.ne.s32.totalorder %s26, %s29
      %p35 = scmp.eq.s32.totalorder %s16, 0
      %p36 = por %p34, %p35
      %p37 = scmp.ne.s32.totalorder %s26, %s29
      %p38 = scmp.eq.s32.totalorder %s21, 1
      %p39 = por %p37, %p38
      %p40 = scmp.ne.s32.totalorder %s29, %s30
      %p41 = scmp.eq.s32.totalorder %s21, 0
      %p42 = por %p40, %p41
      %p43 = scmp.ne.s32.totalorder %s29, %s30
      %p44 = scmp.eq.s32.totalorder %s22, 1
      %p45 = por %p43, %p44
      %p47 = scmp.ne.s32.totalorder %s30, %s46
      %p48 = scmp.eq.s32.totalorder %s22, 0
      %p49 = por %p47, %p48
      %s51 = sadd.s32 %s50, 1
      %p54 = scmp.eq.s32.totalorder %s16, 1
      %p55 = scmp.ne.s32.totalorder %s50, %s52
      %p56 = scmp.eq.s32.totalorder %s16, 0
      %p57 = por %p55, %p56
      %p58 = scmp.ne.s32.totalorder %s50, %s52
      %p59 = scmp.eq.s32.totalorder %s21, 1
      %p60 = por %p58, %p59
      %p61 = scmp.ne.s32.totalorder %s52, %s53
      %p62 = scmp.eq.s32.totalorder %s21, 0
      %p63 = por %p61, %p62
      %p64 = scmp.ne.s32.totalorder %s52, %s53
      %p65 = scmp.eq.s32.totalorder %s22, 1
      %p66 = por %p64, %p65
      %p68 = scmp.ne.s32.totalorder %s53, %s67
      %p69 = scmp.eq.s32.totalorder %s22, 0
      %p70 = por %p68, %p69
      %s72 = sadd.s32 %s71, 1
      %p75 = scmp.eq.s32.totalorder %s16, 1
      %p76 = scmp.ne.s32.totalorder %s71, %s73
      %p77 = scmp.eq.s32.totalorder %s16, 0
      %p78 = por %p76, %p77
      %p79 = scmp.ne.s32.totalorder %s71, %s73
      %p80 = scmp.eq.s32.totalorder %s21, 1
      %p81 = por %p79, %p80
      %p82 = scmp.ne.s32.totalorder %s73, %s74
      %p83 = scmp.eq.s32.totalorder %s21, 0
      %p84 = por %p82, %p83
      %p85 = scmp.ne.s32.totalorder %s73, %s74
      %p86 = scmp.eq.s32.totalorder %s22, 1
      %p87 = por %p85, %p86
      %p89 = scmp.ne.s32.totalorder %s74, %s88
      %p90 = scmp.eq.s32.totalorder %s22, 0
      %p91 = por %p89, %p90
      %s92 = ssub.s32 %s16, %s23
      %p93 = scmp.eq.s32.totalorder %s92, 0
      %s95 = sadd.s32 %s94, 1
      %s96 = scalar_select %p93, %s94, %s95
      %p99 = pneg %p93
      %p100 = scmp.eq.s32.totalorder %s16, 1
      %p101 = por %p99, %p100
      %p102 = scmp.ne.s32.totalorder %s94, %s97
      %p103 = scmp.eq.s32.totalorder %s16, 0
      %p104 = por %p102, %p103
      %p105 = scmp.ne.s32.totalorder %s94, %s97
      %p106 = scmp.eq.s32.totalorder %s21, 1
      %p107 = por %p105, %p106
      %p108 = scmp.ne.s32.totalorder %s97, %s98
      %p109 = scmp.eq.s32.totalorder %s21, 0
      %p110 = por %p108, %p109
      %p111 = scmp.ne.s32.totalorder %s97, %s98
      %p112 = scmp.eq.s32.totalorder %s22, 1
      %p113 = por %p111, %p112
      %p115 = scmp.ne.s32.totalorder %s98, %s114
      %p116 = scmp.eq.s32.totalorder %s22, 0
      %p117 = por %p115, %p116
      %p118 = scmp.le.s32.totalorder 1, %s16
      %p119 = scmp.lt.s32.totalorder %s16, 3
      %p120 = pnand %p118, %p119
      %p121 = pneg %p120
      // Predicated region
      $region9: #{tpu_custom_call.1} parent=5 // pred_check
        _
      $region10: #{tpu_custom_call.1} parent=5 // pred_check_branch
        %123 = sbr.rel (%p120) target = $region12
      $region11: #{tpu_custom_call.1} parent=5 // pred_region
        %s124 = ssub.s32 %s16, 1
        // Predicated region
        $region13: #{tpu_custom_call.1} parent=11 // pred_check
          %p125 = pneg %p63
        $region14: #{tpu_custom_call.1} parent=11 // pred_check_branch
          %127 = sbr.rel (%p125) target = $region16
        $region15: #{tpu_custom_call.1} parent=11 // pred_region
          %s129 = ssub.s32 4096, 4096
          %130 = vsyncadd [#allocation6], %s129
          %s131 = sshll.u32 [#allocation5], 4
          %s132 = int_to_ptr.vmem [resolvable:$true] %s131
          %137 = dma.hbm_to_vmem [thread:$0]  %s1, 4096, %s132, [#allocation6], 64, 64, 4
        $region16: #{tpu_custom_call.1} parent=11 // pred_fallthru
          _
        // Predicated region
        $region17: #{tpu_custom_call.1} parent=11 // pred_check
          %p138 = pneg %p84
        $region18: #{tpu_custom_call.1} parent=11 // pred_check_branch
          %140 = sbr.rel (%p138) target = $region20
        $region19: #{tpu_custom_call.1} parent=11 // pred_region
          _
        $region20: #{tpu_custom_call.1} parent=11 // pred_fallthru
          _
      $region12: #{tpu_custom_call.1} parent=5 // pred_fallthru
        _
      %p141 = scmp.lt.s32.totalorder %s16, 2
      // Predicated region
      $region21: #{tpu_custom_call.1} parent=5 // pred_check
        %p142 = pneg %p141
      $region22: #{tpu_custom_call.1} parent=5 // pred_check_branch
        %144 = sbr.rel (%p142) target = $region24
      $region23: #{tpu_custom_call.1} parent=5 // pred_region
        // Predicated region
        $region25: #{tpu_custom_call.1} parent=23 // pred_check
          %p145 = pneg %p36
        $region26: #{tpu_custom_call.1} parent=23 // pred_check_branch
          %147 = sbr.rel (%p145) target = $region28
        $region27: #{tpu_custom_call.1} parent=23 // pred_region
          %s148 = sand.u32 %s26, 1
          %s149 = scalar_lea.sflag [#allocation3], %s148
          %s150 = sand.u32 %s26, 1
          %s151 = smul.addr %s150, 512
          %s152 = scalar_lea.vmem [#allocation2], %s151
          %s153 = smul.u32 32, %s16
          %s155 = ssub.s32 8192, 8192
          %156 = vsyncadd %s149, %s155
          %s157 = smul.addr %s153, 4
          %s158 = smul.addr %s157, 64
          %s159 = scalar_lea.hbm %s0, %s158
          %s160 = sshll.u32 %s152, 4
          %s161 = int_to_ptr.vmem [resolvable:$true] %s160
          %166 = dma.hbm_to_vmem [thread:$0]  %s159, 8192, %s161, %s149, 256, 256, 16
        $region28: #{tpu_custom_call.1} parent=23 // pred_fallthru
          _
      $region24: #{tpu_custom_call.1} parent=5 // pred_fallthru
        _
      %p167 = scmp.le.s32.totalorder 1, %s16
      %p168 = scmp.lt.s32.totalorder %s16, 3
      %p169 = pnand %p167, %p168
      %p170 = pneg %p169
      // Predicated region
      $region29: #{tpu_custom_call.1} parent=5 // pred_check
        _
      $region30: #{tpu_custom_call.1} parent=5 // pred_check_branch
        %172 = sbr.rel (%p169) target = $region32
      $region31: #{tpu_custom_call.1} parent=5 // pred_region
        %s173 = ssub.s32 %s16, 1
        %s174 = sand.u32 %s29, 1
        %s175 = scalar_lea.sflag [#allocation3], %s174
        %s176 = sand.u32 %s29, 1
        %s177 = smul.addr %s176, 512
        %s178 = scalar_lea.vmem [#allocation2], %s177
        // Predicated region
        $region33: #{tpu_custom_call.1} parent=31 // pred_check
          %p179 = pneg %p42
        $region34: #{tpu_custom_call.1} parent=31 // pred_check_branch
          %181 = sbr.rel (%p179) target = $region36
        $region35: #{tpu_custom_call.1} parent=31 // pred_region
          %182 = dma.done %s175, 8192
        $region36: #{tpu_custom_call.1} parent=31 // pred_fallthru
          _
        // Predicated region
        $region37: #{tpu_custom_call.1} parent=31 // pred_check
          %p183 = pneg %p63
        $region38: #{tpu_custom_call.1} parent=31 // pred_check_branch
          %185 = sbr.rel (%p183) target = $region40
        $region39: #{tpu_custom_call.1} parent=31 // pred_region
          %186 = dma.done [#allocation6], 4096
        $region40: #{tpu_custom_call.1} parent=31 // pred_fallthru
          _
        %s187 = sand.u32 %s29, 1
        %s188 = scalar_lea.sflag [#allocation3], %s187
        %s189 = sand.u32 %s29, 1
        %s190 = smul.addr %s189, 512
        %s191 = scalar_lea.vmem [#allocation2], %s190
        %p192 = pneg %p42
        %p193 = pneg %p39
        %p194 = pneg %p63
        %p195 = pneg %p60
        %p196 = pneg %p84
        %p197 = pneg %p81
        %p198 = pneg %p110
        %p199 = pneg %p107
        %s200 = sand.u32 %s97, 1
        %s201 = scalar_lea.sflag [#allocation4], %s200
        %s202 = sand.u32 %s97, 1
        %s203 = smul.addr %s202, 256
        %s204 = scalar_lea.vmem [#allocation7], %s203
        %s205 = smul.u32 32, %s21
        %s206 = smul.u32 32, %s21
        %v208 = vld [vmem:[%s178] sm:$0xff]
        %v209 = vld [vmem:[%s178 + $0x8] sm:$0xff]
        %v210 = vld [vmem:[%s178 + $0x10] sm:$0xff]
        %v211 = vld [vmem:[%s178 + $0x18] sm:$0xff]
        %v212 = vld [vmem:[%s178 + $0x20] sm:$0xff]
        %v213 = vld [vmem:[%s178 + $0x28] sm:$0xff]
        %v214 = vld [vmem:[%s178 + $0x30] sm:$0xff]
        %v215 = vld [vmem:[%s178 + $0x38] sm:$0xff]
        %v216 = vld [vmem:[%s178 + $0x40] sm:$0xff]
        %v217 = vld [vmem:[%s178 + $0x48] sm:$0xff]
        %v218 = vld [vmem:[%s178 + $0x50] sm:$0xff]
        %v219 = vld [vmem:[%s178 + $0x58] sm:$0xff]
        %v220 = vld [vmem:[%s178 + $0x60] sm:$0xff]
        %v221 = vld [vmem:[%s178 + $0x68] sm:$0xff]
        %v222 = vld [vmem:[%s178 + $0x70] sm:$0xff]
        %v223 = vld [vmem:[%s178 + $0x78] sm:$0xff]
        %v224 = vld [vmem:[%s178 + $0x80] sm:$0xff]
        %v225 = vld [vmem:[%s178 + $0x88] sm:$0xff]
        %v226 = vld [vmem:[%s178 + $0x90] sm:$0xff]
        %v227 = vld [vmem:[%s178 + $0x98] sm:$0xff]
        %v228 = vld [vmem:[%s178 + $0xa0] sm:$0xff]
        %v229 = vld [vmem:[%s178 + $0xa8] sm:$0xff]
        %v230 = vld [vmem:[%s178 + $0xb0] sm:$0xff]
        %v231 = vld [vmem:[%s178 + $0xb8] sm:$0xff]
        %v232 = vld [vmem:[%s178 + $0xc0] sm:$0xff]
        %v233 = vld [vmem:[%s178 + $0xc8] sm:$0xff]
        %v234 = vld [vmem:[%s178 + $0xd0] sm:$0xff]
        %v235 = vld [vmem:[%s178 + $0xd8] sm:$0xff]
        %v236 = vld [vmem:[%s178 + $0xe0] sm:$0xff]
        %v237 = vld [vmem:[%s178 + $0xe8] sm:$0xff]
        %v238 = vld [vmem:[%s178 + $0xf0] sm:$0xff]
        %v239 = vld [vmem:[%s178 + $0xf8] sm:$0xff]
        %v240 = vld [vmem:[%s178 + $0x100] sm:$0xff]
        %v241 = vld [vmem:[%s178 + $0x108] sm:$0xff]
        %v242 = vld [vmem:[%s178 + $0x110] sm:$0xff]
        %v243 = vld [vmem:[%s178 + $0x118] sm:$0xff]
        %v244 = vld [vmem:[%s178 + $0x120] sm:$0xff]
        %v245 = vld [vmem:[%s178 + $0x128] sm:$0xff]
        %v246 = vld [vmem:[%s178 + $0x130] sm:$0xff]
        %v247 = vld [vmem:[%s178 + $0x138] sm:$0xff]
        %v248 = vld [vmem:[%s178 + $0x140] sm:$0xff]
        %v249 = vld [vmem:[%s178 + $0x148] sm:$0xff]
        %v250 = vld [vmem:[%s178 + $0x150] sm:$0xff]
        %v251 = vld [vmem:[%s178 + $0x158] sm:$0xff]
        %v252 = vld [vmem:[%s178 + $0x160] sm:$0xff]
        %v253 = vld [vmem:[%s178 + $0x168] sm:$0xff]
        %v254 = vld [vmem:[%s178 + $0x170] sm:$0xff]
        %v255 = vld [vmem:[%s178 + $0x178] sm:$0xff]
        %v256 = vld [vmem:[%s178 + $0x180] sm:$0xff]
        %v257 = vld [vmem:[%s178 + $0x188] sm:$0xff]
        %v258 = vld [vmem:[%s178 + $0x190] sm:$0xff]
        %v259 = vld [vmem:[%s178 + $0x198] sm:$0xff]
        %v260 = vld [vmem:[%s178 + $0x1a0] sm:$0xff]
        %v261 = vld [vmem:[%s178 + $0x1a8] sm:$0xff]
        %v262 = vld [vmem:[%s178 + $0x1b0] sm:$0xff]
        %v263 = vld [vmem:[%s178 + $0x1b8] sm:$0xff]
        %v264 = vld [vmem:[%s178 + $0x1c0] sm:$0xff]
        %v265 = vld [vmem:[%s178 + $0x1c8] sm:$0xff]
        %v266 = vld [vmem:[%s178 + $0x1d0] sm:$0xff]
        %v267 = vld [vmem:[%s178 + $0x1d8] sm:$0xff]
        %v268 = vld [vmem:[%s178 + $0x1e0] sm:$0xff]
        %v269 = vld [vmem:[%s178 + $0x1e8] sm:$0xff]
        %v270 = vld [vmem:[%s178 + $0x1f0] sm:$0xff]
        %v271 = vld [vmem:[%s178 + $0x1f8] sm:$0xff]
        %v272 = vld [vmem:[#allocation5] sm:$0xf]
        %v273 = vld [vmem:[#allocation5 + $0x4] sm:$0xf]
        %v274 = vld [vmem:[#allocation5 + $0x8] sm:$0xf]
        %v275 = vld [vmem:[#allocation5 + $0xc] sm:$0xf]
        %v276 = vld [vmem:[#allocation5 + $0x10] sm:$0xf]
        %v277 = vld [vmem:[#allocation5 + $0x14] sm:$0xf]
        %v278 = vld [vmem:[#allocation5 + $0x18] sm:$0xf]
        %v279 = vld [vmem:[#allocation5 + $0x1c] sm:$0xf]
        %v280 = vld [vmem:[#allocation5 + $0x20] sm:$0xf]
        %v281 = vld [vmem:[#allocation5 + $0x24] sm:$0xf]
        %v282 = vld [vmem:[#allocation5 + $0x28] sm:$0xf]
        %v283 = vld [vmem:[#allocation5 + $0x2c] sm:$0xf]
        %v284 = vld [vmem:[#allocation5 + $0x30] sm:$0xf]
        %v285 = vld [vmem:[#allocation5 + $0x34] sm:$0xf]
        %v286 = vld [vmem:[#allocation5 + $0x38] sm:$0xf]
        %v287 = vld [vmem:[#allocation5 + $0x3c] sm:$0xf]
        %v288 = vld [vmem:[#allocation5 + $0x40] sm:$0xf]
        %v289 = vld [vmem:[#allocation5 + $0x44] sm:$0xf]
        %v290 = vld [vmem:[#allocation5 + $0x48] sm:$0xf]
        %v291 = vld [vmem:[#allocation5 + $0x4c] sm:$0xf]
        %v292 = vld [vmem:[#allocation5 + $0x50] sm:$0xf]
        %v293 = vld [vmem:[#allocation5 + $0x54] sm:$0xf]
        %v294 = vld [vmem:[#allocation5 + $0x58] sm:$0xf]
        %v295 = vld [vmem:[#allocation5 + $0x5c] sm:$0xf]
        %v296 = vld [vmem:[#allocation5 + $0x60] sm:$0xf]
        %v297 = vld [vmem:[#allocation5 + $0x64] sm:$0xf]
        %v298 = vld [vmem:[#allocation5 + $0x68] sm:$0xf]
        %v299 = vld [vmem:[#allocation5 + $0x6c] sm:$0xf]
        %v300 = vld [vmem:[#allocation5 + $0x70] sm:$0xf]
        %v301 = vld [vmem:[#allocation5 + $0x74] sm:$0xf]
        %v302 = vld [vmem:[#allocation5 + $0x78] sm:$0xf]
        %v303 = vld [vmem:[#allocation5 + $0x7c] sm:$0xf]
        %v304 = vld [vmem:[#allocation5 + $0x80] sm:$0xf]
        %v305 = vld [vmem:[#allocation5 + $0x84] sm:$0xf]
        %v306 = vld [vmem:[#allocation5 + $0x88] sm:$0xf]
        %v307 = vld [vmem:[#allocation5 + $0x8c] sm:$0xf]
        %v308 = vld [vmem:[#allocation5 + $0x90] sm:$0xf]
        %v309 = vld [vmem:[#allocation5 + $0x94] sm:$0xf]
        %v310 = vld [vmem:[#allocation5 + $0x98] sm:$0xf]
        %v311 = vld [vmem:[#allocation5 + $0x9c] sm:$0xf]
        %v312 = vld [vmem:[#allocation5 + $0xa0] sm:$0xf]
        %v313 = vld [vmem:[#allocation5 + $0xa4] sm:$0xf]
        %v314 = vld [vmem:[#allocation5 + $0xa8] sm:$0xf]
        %v315 = vld [vmem:[#allocation5 + $0xac] sm:$0xf]
        %v316 = vld [vmem:[#allocation5 + $0xb0] sm:$0xf]
        %v317 = vld [vmem:[#allocation5 + $0xb4] sm:$0xf]
        %v318 = vld [vmem:[#allocation5 + $0xb8] sm:$0xf]
        %v319 = vld [vmem:[#allocation5 + $0xbc] sm:$0xf]
        %v320 = vld [vmem:[#allocation5 + $0xc0] sm:$0xf]
        %v321 = vld [vmem:[#allocation5 + $0xc4] sm:$0xf]
        %v322 = vld [vmem:[#allocation5 + $0xc8] sm:$0xf]
        %v323 = vld [vmem:[#allocation5 + $0xcc] sm:$0xf]
        %v324 = vld [vmem:[#allocation5 + $0xd0] sm:$0xf]
        %v325 = vld [vmem:[#allocation5 + $0xd4] sm:$0xf]
        %v326 = vld [vmem:[#allocation5 + $0xd8] sm:$0xf]
        %v327 = vld [vmem:[#allocation5 + $0xdc] sm:$0xf]
        %v328 = vld [vmem:[#allocation5 + $0xe0] sm:$0xf]
        %v329 = vld [vmem:[#allocation5 + $0xe4] sm:$0xf]
        %v330 = vld [vmem:[#allocation5 + $0xe8] sm:$0xf]
        %v331 = vld [vmem:[#allocation5 + $0xec] sm:$0xf]
        %v332 = vld [vmem:[#allocation5 + $0xf0] sm:$0xf]
        %v333 = vld [vmem:[#allocation5 + $0xf4] sm:$0xf]
        %v334 = vld [vmem:[#allocation5 + $0xf8] sm:$0xf]
        %v335 = vld [vmem:[#allocation5 + $0xfc] sm:$0xf]
        %v336 = vld [vmem:[%s2] sm:$0x1]
        %v338 = vlaneseq
        %v339 = vshrl.u32 %v338, 7
        %v340 = vsub.s32 0, %v339
        %v341 = vrot.slane %v336, %v340
        %v407 = vunpack.c.l.b16 %v208
        %v408 = vunpack.c.h.b16 %v208
        %v409 = vunpack.c.l.b16 %v209
        %v410 = vunpack.c.h.b16 %v209
        %v411 = vunpack.c.l.b16 %v210
        %v412 = vunpack.c.h.b16 %v210
        %v413 = vunpack.c.l.b16 %v211
        %v414 = vunpack.c.h.b16 %v211
        %v415 = vunpack.c.l.b16 %v212
        %v416 = vunpack.c.h.b16 %v212
        %v417 = vunpack.c.l.b16 %v213
        %v418 = vunpack.c.h.b16 %v213
        %v419 = vunpack.c.l.b16 %v214
        %v420 = vunpack.c.h.b16 %v214
        %v421 = vunpack.c.l.b16 %v215
        %v422 = vunpack.c.h.b16 %v215
        %v423 = vunpack.c.l.b16 %v216
        %v424 = vunpack.c.h.b16 %v216
        %v425 = vunpack.c.l.b16 %v217
        %v426 = vunpack.c.h.b16 %v217
        %v427 = vunpack.c.l.b16 %v218
        %v428 = vunpack.c.h.b16 %v218
        %v429 = vunpack.c.l.b16 %v219
        %v430 = vunpack.c.h.b16 %v219
        %v431 = vunpack.c.l.b16 %v220
        %v432 = vunpack.c.h.b16 %v220
        %v433 = vunpack.c.l.b16 %v221
        %v434 = vunpack.c.h.b16 %v221
        %v435 = vunpack.c.l.b16 %v222
        %v436 = vunpack.c.h.b16 %v222
        %v437 = vunpack.c.l.b16 %v223
        %v438 = vunpack.c.h.b16 %v223
        %v439 = vunpack.c.l.b16 %v224
        %v440 = vunpack.c.h.b16 %v224
        %v441 = vunpack.c.l.b16 %v225
        %v442 = vunpack.c.h.b16 %v225
        %v443 = vunpack.c.l.b16 %v226
        %v444 = vunpack.c.h.b16 %v226
        %v445 = vunpack.c.l.b16 %v227
        %v446 = vunpack.c.h.b16 %v227
        %v447 = vunpack.c.l.b16 %v228
        %v448 = vunpack.c.h.b16 %v228
        %v449 = vunpack.c.l.b16 %v229
        %v450 = vunpack.c.h.b16 %v229
        %v451 = vunpack.c.l.b16 %v230
        %v452 = vunpack.c.h.b16 %v230
        %v453 = vunpack.c.l.b16 %v231
        %v454 = vunpack.c.h.b16 %v231
        %v455 = vunpack.c.l.b16 %v232
        %v456 = vunpack.c.h.b16 %v232
        %v457 = vunpack.c.l.b16 %v233
        %v458 = vunpack.c.h.b16 %v233
        %v459 = vunpack.c.l.b16 %v234
        %v460 = vunpack.c.h.b16 %v234
        %v461 = vunpack.c.l.b16 %v235
        %v462 = vunpack.c.h.b16 %v235
        %v463 = vunpack.c.l.b16 %v236
        %v464 = vunpack.c.h.b16 %v236
        %v465 = vunpack.c.l.b16 %v237
        %v466 = vunpack.c.h.b16 %v237
        %v467 = vunpack.c.l.b16 %v238
        %v468 = vunpack.c.h.b16 %v238
        %v469 = vunpack.c.l.b16 %v239
        %v470 = vunpack.c.h.b16 %v239
        %v471 = vunpack.c.l.b16 %v240
        %v472 = vunpack.c.h.b16 %v240
        %v473 = vunpack.c.l.b16 %v241
        %v474 = vunpack.c.h.b16 %v241
        %v475 = vunpack.c.l.b16 %v242
        %v476 = vunpack.c.h.b16 %v242
        %v477 = vunpack.c.l.b16 %v243
        %v478 = vunpack.c.h.b16 %v243
        %v479 = vunpack.c.l.b16 %v244
        %v480 = vunpack.c.h.b16 %v244
        %v481 = vunpack.c.l.b16 %v245
        %v482 = vunpack.c.h.b16 %v245
        %v483 = vunpack.c.l.b16 %v246
        %v484 = vunpack.c.h.b16 %v246
        %v485 = vunpack.c.l.b16 %v247
        %v486 = vunpack.c.h.b16 %v247
        %v487 = vunpack.c.l.b16 %v248
        %v488 = vunpack.c.h.b16 %v248
        %v489 = vunpack.c.l.b16 %v249
        %v490 = vunpack.c.h.b16 %v249
        %v491 = vunpack.c.l.b16 %v250
        %v492 = vunpack.c.h.b16 %v250
        %v493 = vunpack.c.l.b16 %v251
        %v494 = vunpack.c.h.b16 %v251
        %v495 = vunpack.c.l.b16 %v252
        %v496 = vunpack.c.h.b16 %v252
        %v497 = vunpack.c.l.b16 %v253
        %v498 = vunpack.c.h.b16 %v253
        %v499 = vunpack.c.l.b16 %v254
        %v500 = vunpack.c.h.b16 %v254
        %v501 = vunpack.c.l.b16 %v255
        %v502 = vunpack.c.h.b16 %v255
        %v503 = vunpack.c.l.b16 %v256
        %v504 = vunpack.c.h.b16 %v256
        %v505 = vunpack.c.l.b16 %v257
        %v506 = vunpack.c.h.b16 %v257
        %v507 = vunpack.c.l.b16 %v258
        %v508 = vunpack.c.h.b16 %v258
        %v509 = vunpack.c.l.b16 %v259
        %v510 = vunpack.c.h.b16 %v259
        %v511 = vunpack.c.l.b16 %v260
        %v512 = vunpack.c.h.b16 %v260
        %v513 = vunpack.c.l.b16 %v261
        %v514 = vunpack.c.h.b16 %v261
        %v515 = vunpack.c.l.b16 %v262
        %v516 = vunpack.c.h.b16 %v262
        %v517 = vunpack.c.l.b16 %v263
        %v518 = vunpack.c.h.b16 %v263
        %v519 = vunpack.c.l.b16 %v264
        %v520 = vunpack.c.h.b16 %v264
        %v521 = vunpack.c.l.b16 %v265
        %v522 = vunpack.c.h.b16 %v265
        %v523 = vunpack.c.l.b16 %v266
        %v524 = vunpack.c.h.b16 %v266
        %v525 = vunpack.c.l.b16 %v267
        %v526 = vunpack.c.h.b16 %v267
        %v527 = vunpack.c.l.b16 %v268
        %v528 = vunpack.c.h.b16 %v268
        %v529 = vunpack.c.l.b16 %v269
        %v530 = vunpack.c.h.b16 %v269
        %v531 = vunpack.c.l.b16 %v270
        %v532 = vunpack.c.h.b16 %v270
        %v533 = vunpack.c.l.b16 %v271
        %v534 = vunpack.c.h.b16 %v271
        %v535 = vpack.c.b16 %v411, %v407
        %v536 = vpack.c.b16 %v412, %v408
        %v537 = vpack.c.b16 %v413, %v409
        %v538 = vpack.c.b16 %v414, %v410
        %v539 = vpack.c.b16 %v419, %v415
        %v540 = vpack.c.b16 %v420, %v416
        %v541 = vpack.c.b16 %v421, %v417
        %v542 = vpack.c.b16 %v422, %v418
        %v543 = vpack.c.b16 %v427, %v423
        %v544 = vpack.c.b16 %v428, %v424
        %v545 = vpack.c.b16 %v429, %v425
        %v546 = vpack.c.b16 %v430, %v426
        %v547 = vpack.c.b16 %v435, %v431
        %v548 = vpack.c.b16 %v436, %v432
        %v549 = vpack.c.b16 %v437, %v433
        %v550 = vpack.c.b16 %v438, %v434
        %v551 = vpack.c.b16 %v443, %v439
        %v552 = vpack.c.b16 %v444, %v440
        %v553 = vpack.c.b16 %v445, %v441
        %v554 = vpack.c.b16 %v446, %v442
        %v555 = vpack.c.b16 %v451, %v447
        %v556 = vpack.c.b16 %v452, %v448
        %v557 = vpack.c.b16 %v453, %v449
        %v558 = vpack.c.b16 %v454, %v450
        %v559 = vpack.c.b16 %v459, %v455
        %v560 = vpack.c.b16 %v460, %v456
        %v561 = vpack.c.b16 %v461, %v457
        %v562 = vpack.c.b16 %v462, %v458
        %v563 = vpack.c.b16 %v467, %v463
        %v564 = vpack.c.b16 %v468, %v464
        %v565 = vpack.c.b16 %v469, %v465
        %v566 = vpack.c.b16 %v470, %v466
        %v567 = vpack.c.b16 %v475, %v471
        %v568 = vpack.c.b16 %v476, %v472
        %v569 = vpack.c.b16 %v477, %v473
        %v570 = vpack.c.b16 %v478, %v474
        %v571 = vpack.c.b16 %v483, %v479
        %v572 = vpack.c.b16 %v484, %v480
        %v573 = vpack.c.b16 %v485, %v481
        %v574 = vpack.c.b16 %v486, %v482
        %v575 = vpack.c.b16 %v491, %v487
        %v576 = vpack.c.b16 %v492, %v488
        %v577 = vpack.c.b16 %v493, %v489
        %v578 = vpack.c.b16 %v494, %v490
        %v579 = vpack.c.b16 %v499, %v495
        %v580 = vpack.c.b16 %v500, %v496
        %v581 = vpack.c.b16 %v501, %v497
        %v582 = vpack.c.b16 %v502, %v498
        %v583 = vpack.c.b16 %v507, %v503
        %v584 = vpack.c.b16 %v508, %v504
        %v585 = vpack.c.b16 %v509, %v505
        %v586 = vpack.c.b16 %v510, %v506
        %v587 = vpack.c.b16 %v515, %v511
        %v588 = vpack.c.b16 %v516, %v512
        %v589 = vpack.c.b16 %v517, %v513
        %v590 = vpack.c.b16 %v518, %v514
        %v591 = vpack.c.b16 %v523, %v519
        %v592 = vpack.c.b16 %v524, %v520
        %v593 = vpack.c.b16 %v525, %v521
        %v594 = vpack.c.b16 %v526, %v522
        %v595 = vpack.c.b16 %v531, %v527
        %v596 = vpack.c.b16 %v532, %v528
        %v597 = vpack.c.b16 %v533, %v529
        %v598 = vpack.c.b16 %v534, %v530
        %v727 = vunpack.c.l.b16 %v272
        %v728 = vunpack.c.l.b16 %v273
        %v729 = vunpack.c.l.b16 %v274
        %v730 = vunpack.c.l.b16 %v275
        %v731 = vunpack.c.l.b16 %v276
        %v732 = vunpack.c.l.b16 %v277
        %v733 = vunpack.c.l.b16 %v278
        %v734 = vunpack.c.l.b16 %v279
        %v735 = vunpack.c.l.b16 %v280
        %v736 = vunpack.c.l.b16 %v281
        %v737 = vunpack.c.l.b16 %v282
        %v738 = vunpack.c.l.b16 %v283
        %v739 = vunpack.c.l.b16 %v284
        %v740 = vunpack.c.l.b16 %v285
        %v741 = vunpack.c.l.b16 %v286
        %v742 = vunpack.c.l.b16 %v287
        %v743 = vunpack.c.l.b16 %v288
        %v744 = vunpack.c.l.b16 %v289
        %v745 = vunpack.c.l.b16 %v290
        %v746 = vunpack.c.l.b16 %v291
        %v747 = vunpack.c.l.b16 %v292
        %v748 = vunpack.c.l.b16 %v293
        %v749 = vunpack.c.l.b16 %v294
        %v750 = vunpack.c.l.b16 %v295
        %v751 = vunpack.c.l.b16 %v296
        %v752 = vunpack.c.l.b16 %v297
        %v753 = vunpack.c.l.b16 %v298
        %v754 = vunpack.c.l.b16 %v299
        %v755 = vunpack.c.l.b16 %v300
        %v756 = vunpack.c.l.b16 %v301
        %v757 = vunpack.c.l.b16 %v302
        %v758 = vunpack.c.l.b16 %v303
        %v759 = vunpack.c.l.b16 %v304
        %v760 = vunpack.c.l.b16 %v305
        %v761 = vunpack.c.l.b16 %v306
        %v762 = vunpack.c.l.b16 %v307
        %v763 = vunpack.c.l.b16 %v308
        %v764 = vunpack.c.l.b16 %v309
        %v765 = vunpack.c.l.b16 %v310
        %v766 = vunpack.c.l.b16 %v311
        %v767 = vunpack.c.l.b16 %v312
        %v768 = vunpack.c.l.b16 %v313
        %v769 = vunpack.c.l.b16 %v314
        %v770 = vunpack.c.l.b16 %v315
        %v771 = vunpack.c.l.b16 %v316
        %v772 = vunpack.c.l.b16 %v317
        %v773 = vunpack.c.l.b16 %v318
        %v774 = vunpack.c.l.b16 %v319
        %v775 = vunpack.c.l.b16 %v320
        %v776 = vunpack.c.l.b16 %v321
        %v777 = vunpack.c.l.b16 %v322
        %v778 = vunpack.c.l.b16 %v323
        %v779 = vunpack.c.l.b16 %v324
        %v780 = vunpack.c.l.b16 %v325
        %v781 = vunpack.c.l.b16 %v326
        %v782 = vunpack.c.l.b16 %v327
        %v783 = vunpack.c.l.b16 %v328
        %v784 = vunpack.c.l.b16 %v329
        %v785 = vunpack.c.l.b16 %v330
        %v786 = vunpack.c.l.b16 %v331
        %v787 = vunpack.c.l.b16 %v332
        %v788 = vunpack.c.l.b16 %v333
        %v789 = vunpack.c.l.b16 %v334
        %v790 = vunpack.c.l.b16 %v335
        %v791 = vpack.c.b16 %v728, %v727
        %v792 = vpack.c.b16 %v730, %v729
        %v793 = vpack.c.b16 %v732, %v731
        %v794 = vpack.c.b16 %v734, %v733
        %v795 = vpack.c.b16 %v736, %v735
        %v796 = vpack.c.b16 %v738, %v737
        %v797 = vpack.c.b16 %v740, %v739
        %v798 = vpack.c.b16 %v742, %v741
        %v799 = vpack.c.b16 %v744, %v743
        %v800 = vpack.c.b16 %v746, %v745
        %v801 = vpack.c.b16 %v748, %v747
        %v802 = vpack.c.b16 %v750, %v749
        %v803 = vpack.c.b16 %v752, %v751
        %v804 = vpack.c.b16 %v754, %v753
        %v805 = vpack.c.b16 %v756, %v755
        %v806 = vpack.c.b16 %v758, %v757
        %v807 = vpack.c.b16 %v760, %v759
        %v808 = vpack.c.b16 %v762, %v761
        %v809 = vpack.c.b16 %v764, %v763
        %v810 = vpack.c.b16 %v766, %v765
        %v811 = vpack.c.b16 %v768, %v767
        %v812 = vpack.c.b16 %v770, %v769
        %v813 = vpack.c.b16 %v772, %v771
        %v814 = vpack.c.b16 %v774, %v773
        %v815 = vpack.c.b16 %v776, %v775
        %v816 = vpack.c.b16 %v778, %v777
        %v817 = vpack.c.b16 %v780, %v779
        %v818 = vpack.c.b16 %v782, %v781
        %v819 = vpack.c.b16 %v784, %v783
        %v820 = vpack.c.b16 %v786, %v785
        %v821 = vpack.c.b16 %v788, %v787
        %v822 = vpack.c.b16 %v790, %v789
        %855 = vmatprep.subr.bf16.mxu0 0
        %856 = vmatpush1.bf16.msra.mxu0 %v798
        %857 = vmatprep.subr.bf16.mxu0 0
        %858 = vmatpush1.bf16.msra.mxu0 %v797
        %859 = vmatprep.subr.bf16.mxu0 0
        %860 = vmatpush1.bf16.msra.mxu0 %v796
        %861 = vmatprep.subr.bf16.mxu0 0
        %862 = vmatpush1.bf16.msra.mxu0 %v795
        %863 = vmatprep.subr.bf16.mxu0 0
        %864 = vmatpush1.bf16.msra.mxu0 %v794
        %865 = vmatprep.subr.bf16.mxu0 0
        %866 = vmatpush1.bf16.msra.mxu0 %v793
        %867 = vmatprep.subr.bf16.mxu0 0
        %868 = vmatpush1.bf16.msra.mxu0 %v792
        %869 = vmatprep.subr.bf16.mxu0 0
        %870 = vmatpush1.bf16.msra.mxu0 %v791
        %871 = vmatprep.subr.bf16.mxu0 0
        %872 = vmatpush2.bf16.msra.mxu0 %v806
        %873 = vmatprep.subr.bf16.mxu0 0
        %874 = vmatpush2.bf16.msra.mxu0 %v805
        %875 = vmatprep.subr.bf16.mxu0 0
        %876 = vmatpush2.bf16.msra.mxu0 %v804
        %877 = vmatprep.subr.bf16.mxu0 0
        %878 = vmatpush2.bf16.msra.mxu0 %v803
        %879 = vmatprep.subr.bf16.mxu0 0
        %880 = vmatpush2.bf16.msra.mxu0 %v802
        %881 = vmatprep.subr.bf16.mxu0 0
        %882 = vmatpush2.bf16.msra.mxu0 %v801
        %883 = vmatprep.subr.bf16.mxu0 0
        %884 = vmatpush2.bf16.msra.mxu0 %v800
        %885 = vmatprep.subr.bf16.mxu0 0
        %886 = vmatpush2.bf16.msra.mxu0 %v799
        %887 = vmatprep.mubr.bf16.mxu0 %v536
        %888 = vmatmul.mubr.bf16.gmra.mxu0 %v535
        %v889 = vpop.f32.mrf.mxu0
        %v890 = vadd.f32 %v341, %v889
        %v891 = vpop.f32.mrf.mxu0
        %v892 = vpop.f32.mrf.mxu0
        %v893 = vadd.f32 %v341, %v892
        %v894 = vpop.f32.mrf.mxu0
        %895 = vmatprep.mubr.bf16.mxu0 %v540
        %896 = vmatmul.mubr.bf16.gmra.mxu0 %v539
        %v897 = vpop.f32.mrf.mxu0
        %v898 = vadd.f32 %v341, %v897
        %v899 = vpop.f32.mrf.mxu0
        %v900 = vpop.f32.mrf.mxu0
        %v901 = vadd.f32 %v341, %v900
        %v902 = vpop.f32.mrf.mxu0
        %903 = vmatprep.mubr.bf16.mxu0 %v544
        %904 = vmatmul.mubr.bf16.gmra.mxu0 %v543
        %v905 = vpop.f32.mrf.mxu0
        %v906 = vadd.f32 %v341, %v905
        %v907 = vpop.f32.mrf.mxu0
        %v908 = vpop.f32.mrf.mxu0
        %v909 = vadd.f32 %v341, %v908
        %v910 = vpop.f32.mrf.mxu0
        %911 = vmatprep.mubr.bf16.mxu0 %v548
        %912 = vmatmul.mubr.bf16.gmra.mxu0 %v547
        %v913 = vpop.f32.mrf.mxu0
        %v914 = vadd.f32 %v341, %v913
        %v915 = vpop.f32.mrf.mxu0
        %v916 = vpop.f32.mrf.mxu0
        %v917 = vadd.f32 %v341, %v916
        %v918 = vpop.f32.mrf.mxu0
        %919 = vmatprep.mubr.bf16.mxu0 %v552
        %920 = vmatmul.mubr.bf16.gmra.mxu0 %v551
        %v921 = vpop.f32.mrf.mxu0
        %v922 = vadd.f32 %v341, %v921
        %v923 = vpop.f32.mrf.mxu0
        %v924 = vpop.f32.mrf.mxu0
        %v925 = vadd.f32 %v341, %v924
        %v926 = vpop.f32.mrf.mxu0
        %927 = vmatprep.mubr.bf16.mxu0 %v556
        %928 = vmatmul.mubr.bf16.gmra.mxu0 %v555
        %v929 = vpop.f32.mrf.mxu0
        %v930 = vadd.f32 %v341, %v929
        %v931 = vpop.f32.mrf.mxu0
        %v932 = vpop.f32.mrf.mxu0
        %v933 = vadd.f32 %v341, %v932
        %v934 = vpop.f32.mrf.mxu0
        %935 = vmatprep.mubr.bf16.mxu0 %v560
        %936 = vmatmul.mubr.bf16.gmra.mxu0 %v559
        %v937 = vpop.f32.mrf.mxu0
        %v938 = vadd.f32 %v341, %v937
        %v939 = vpop.f32.mrf.mxu0
        %v940 = vpop.f32.mrf.mxu0
        %v941 = vadd.f32 %v341, %v940
        %v942 = vpop.f32.mrf.mxu0
        %943 = vmatprep.mubr.bf16.mxu0 %v564
        %944 = vmatmul.mubr.bf16.gmra.mxu0 %v563
        %v945 = vpop.f32.mrf.mxu0
        %v946 = vadd.f32 %v341, %v945
        %v947 = vpop.f32.mrf.mxu0
        %v948 = vpop.f32.mrf.mxu0
        %v949 = vadd.f32 %v341, %v948
        %v950 = vpop.f32.mrf.mxu0
        %951 = vmatprep.mubr.bf16.mxu0 %v568
        %952 = vmatmul.mubr.bf16.gmra.mxu0 %v567
        %v953 = vpop.f32.mrf.mxu0
        %v954 = vadd.f32 %v341, %v953
        %v955 = vpop.f32.mrf.mxu0
        %v956 = vpop.f32.mrf.mxu0
        %v957 = vadd.f32 %v341, %v956
        %v958 = vpop.f32.mrf.mxu0
        %959 = vmatprep.mubr.bf16.mxu0 %v572
        %960 = vmatmul.mubr.bf16.gmra.mxu0 %v571
        %v961 = vpop.f32.mrf.mxu0
        %v962 = vadd.f32 %v341, %v961
        %v963 = vpop.f32.mrf.mxu0
        %v964 = vpop.f32.mrf.mxu0
        %v965 = vadd.f32 %v341, %v964
        %v966 = vpop.f32.mrf.mxu0
        %967 = vmatprep.mubr.bf16.mxu0 %v576
        %968 = vmatmul.mubr.bf16.gmra.mxu0 %v575
        %v969 = vpop.f32.mrf.mxu0
        %v970 = vadd.f32 %v341, %v969
        %v971 = vpop.f32.mrf.mxu0
        %v972 = vpop.f32.mrf.mxu0
        %v973 = vadd.f32 %v341, %v972
        %v974 = vpop.f32.mrf.mxu0
        %975 = vmatprep.mubr.bf16.mxu0 %v580
        %976 = vmatmul.mubr.bf16.gmra.mxu0 %v579
        %v977 = vpop.f32.mrf.mxu0
        %v978 = vadd.f32 %v341, %v977
        %v979 = vpop.f32.mrf.mxu0
        %v980 = vpop.f32.mrf.mxu0
        %v981 = vadd.f32 %v341, %v980
        %v982 = vpop.f32.mrf.mxu0
        %983 = vmatprep.mubr.bf16.mxu0 %v584
        %984 = vmatmul.mubr.bf16.gmra.mxu0 %v583
        %v985 = vpop.f32.mrf.mxu0
        %v986 = vadd.f32 %v341, %v985
        %v987 = vpop.f32.mrf.mxu0
        %v988 = vpop.f32.mrf.mxu0
        %v989 = vadd.f32 %v341, %v988
        %v990 = vpop.f32.mrf.mxu0
        %991 = vmatprep.mubr.bf16.mxu0 %v588
        %992 = vmatmul.mubr.bf16.gmra.mxu0 %v587
        %v993 = vpop.f32.mrf.mxu0
        %v994 = vadd.f32 %v341, %v993
        %v995 = vpop.f32.mrf.mxu0
        %v996 = vpop.f32.mrf.mxu0
        %v997 = vadd.f32 %v341, %v996
        %v998 = vpop.f32.mrf.mxu0
        %999 = vmatprep.mubr.bf16.mxu0 %v592
        %1000 = vmatmul.mubr.bf16.gmra.mxu0 %v591
        %v1001 = vpop.f32.mrf.mxu0
        %v1002 = vadd.f32 %v341, %v1001
        %v1003 = vpop.f32.mrf.mxu0
        %v1004 = vpop.f32.mrf.mxu0
        %v1005 = vadd.f32 %v341, %v1004
        %v1006 = vpop.f32.mrf.mxu0
        %1007 = vmatprep.mubr.bf16.mxu0 %v596
        %1008 = vmatmul.mubr.bf16.gmra.mxu0 %v595
        %v1009 = vpop.f32.mrf.mxu0
        %v1010 = vadd.f32 %v341, %v1009
        %v1011 = vpop.f32.mrf.mxu0
        %v1012 = vpop.f32.mrf.mxu0
        %v1013 = vadd.f32 %v341, %v1012
        %v1014 = vpop.f32.mrf.mxu0
        %1015 = vdwg.mxu0
        %1016 = vmatprep.subr.bf16.mxu0 0
        %1017 = vmatpush1.bf16.msra.mxu0 %v814
        %1018 = vmatprep.subr.bf16.mxu0 0
        %1019 = vmatpush1.bf16.msra.mxu0 %v813
        %1020 = vmatprep.subr.bf16.mxu0 0
        %1021 = vmatpush1.bf16.msra.mxu0 %v812
        %1022 = vmatprep.subr.bf16.mxu0 0
        %1023 = vmatpush1.bf16.msra.mxu0 %v811
        %1024 = vmatprep.subr.bf16.mxu0 0
        %1025 = vmatpush1.bf16.msra.mxu0 %v810
        %1026 = vmatprep.subr.bf16.mxu0 0
        %1027 = vmatpush1.bf16.msra.mxu0 %v809
        %1028 = vmatprep.subr.bf16.mxu0 0
        %1029 = vmatpush1.bf16.msra.mxu0 %v808
        %1030 = vmatprep.subr.bf16.mxu0 0
        %1031 = vmatpush1.bf16.msra.mxu0 %v807
        %1032 = vmatprep.subr.bf16.mxu0 0
        %1033 = vmatpush2.bf16.msra.mxu0 %v822
        %1034 = vmatprep.subr.bf16.mxu0 0
        %1035 = vmatpush2.bf16.msra.mxu0 %v821
        %1036 = vmatprep.subr.bf16.mxu0 0
        %1037 = vmatpush2.bf16.msra.mxu0 %v820
        %1038 = vmatprep.subr.bf16.mxu0 0
        %1039 = vmatpush2.bf16.msra.mxu0 %v819
        %1040 = vmatprep.subr.bf16.mxu0 0
        %1041 = vmatpush2.bf16.msra.mxu0 %v818
        %1042 = vmatprep.subr.bf16.mxu0 0
        %1043 = vmatpush2.bf16.msra.mxu0 %v817
        %1044 = vmatprep.subr.bf16.mxu0 0
        %1045 = vmatpush2.bf16.msra.mxu0 %v816
        %1046 = vmatprep.subr.bf16.mxu0 0
        %1047 = vmatpush2.bf16.msra.mxu0 %v815
        %1048 = vmatprep.mubr.bf16.mxu0 %v538
        %1049 = vmatmul.mubr.bf16.gmra.mxu0 %v537
        %v1050 = vpop.f32.mrf.mxu0
        %v1051 = vadd.f32 %v890, %v1050
        %v1052 = vpop.f32.mrf.mxu0
        %v1053 = vpop.f32.mrf.mxu0
        %v1054 = vadd.f32 %v893, %v1053
        %v1055 = vpop.f32.mrf.mxu0
        %1056 = vmatprep.mubr.bf16.mxu0 %v542
        %1057 = vmatmul.mubr.bf16.gmra.mxu0 %v541
        %v1058 = vpop.f32.mrf.mxu0
        %v1059 = vadd.f32 %v898, %v1058
        %v1060 = vpop.f32.mrf.mxu0
        %v1061 = vpop.f32.mrf.mxu0
        %v1062 = vadd.f32 %v901, %v1061
        %v1063 = vpop.f32.mrf.mxu0
        %1064 = vmatprep.mubr.bf16.mxu0 %v546
        %1065 = vmatmul.mubr.bf16.gmra.mxu0 %v545
        %v1066 = vpop.f32.mrf.mxu0
        %v1067 = vadd.f32 %v906, %v1066
        %v1068 = vpop.f32.mrf.mxu0
        %v1069 = vpop.f32.mrf.mxu0
        %v1070 = vadd.f32 %v909, %v1069
        %v1071 = vpop.f32.mrf.mxu0
        %1072 = vmatprep.mubr.bf16.mxu0 %v550
        %1073 = vmatmul.mubr.bf16.gmra.mxu0 %v549
        %v1074 = vpop.f32.mrf.mxu0
        %v1075 = vadd.f32 %v914, %v1074
        %v1076 = vpop.f32.mrf.mxu0
        %v1077 = vpop.f32.mrf.mxu0
        %v1078 = vadd.f32 %v917, %v1077
        %v1079 = vpop.f32.mrf.mxu0
        %1080 = vmatprep.mubr.bf16.mxu0 %v554
        %1081 = vmatmul.mubr.bf16.gmra.mxu0 %v553
        %v1082 = vpop.f32.mrf.mxu0
        %v1083 = vadd.f32 %v922, %v1082
        %v1084 = vpop.f32.mrf.mxu0
        %v1085 = vpop.f32.mrf.mxu0
        %v1086 = vadd.f32 %v925, %v1085
        %v1087 = vpop.f32.mrf.mxu0
        %1088 = vmatprep.mubr.bf16.mxu0 %v558
        %1089 = vmatmul.mubr.bf16.gmra.mxu0 %v557
        %v1090 = vpop.f32.mrf.mxu0
        %v1091 = vadd.f32 %v930, %v1090
        %v1092 = vpop.f32.mrf.mxu0
        %v1093 = vpop.f32.mrf.mxu0
        %v1094 = vadd.f32 %v933, %v1093
        %v1095 = vpop.f32.mrf.mxu0
        %1096 = vmatprep.mubr.bf16.mxu0 %v562
        %1097 = vmatmul.mubr.bf16.gmra.mxu0 %v561
        %v1098 = vpop.f32.mrf.mxu0
        %v1099 = vadd.f32 %v938, %v1098
        %v1100 = vpop.f32.mrf.mxu0
        %v1101 = vpop.f32.mrf.mxu0
        %v1102 = vadd.f32 %v941, %v1101
        %v1103 = vpop.f32.mrf.mxu0
        %1104 = vmatprep.mubr.bf16.mxu0 %v566
        %1105 = vmatmul.mubr.bf16.gmra.mxu0 %v565
        %v1106 = vpop.f32.mrf.mxu0
        %v1107 = vadd.f32 %v946, %v1106
        %v1108 = vpop.f32.mrf.mxu0
        %v1109 = vpop.f32.mrf.mxu0
        %v1110 = vadd.f32 %v949, %v1109
        %v1111 = vpop.f32.mrf.mxu0
        %1112 = vmatprep.mubr.bf16.mxu0 %v570
        %1113 = vmatmul.mubr.bf16.gmra.mxu0 %v569
        %v1114 = vpop.f32.mrf.mxu0
        %v1115 = vadd.f32 %v954, %v1114
        %v1116 = vpop.f32.mrf.mxu0
        %v1117 = vpop.f32.mrf.mxu0
        %v1118 = vadd.f32 %v957, %v1117
        %v1119 = vpop.f32.mrf.mxu0
        %1120 = vmatprep.mubr.bf16.mxu0 %v574
        %1121 = vmatmul.mubr.bf16.gmra.mxu0 %v573
        %v1122 = vpop.f32.mrf.mxu0
        %v1123 = vadd.f32 %v962, %v1122
        %v1124 = vpop.f32.mrf.mxu0
        %v1125 = vpop.f32.mrf.mxu0
        %v1126 = vadd.f32 %v965, %v1125
        %v1127 = vpop.f32.mrf.mxu0
        %1128 = vmatprep.mubr.bf16.mxu0 %v578
        %1129 = vmatmul.mubr.bf16.gmra.mxu0 %v577
        %v1130 = vpop.f32.mrf.mxu0
        %v1131 = vadd.f32 %v970, %v1130
        %v1132 = vpop.f32.mrf.mxu0
        %v1133 = vpop.f32.mrf.mxu0
        %v1134 = vadd.f32 %v973, %v1133
        %v1135 = vpop.f32.mrf.mxu0
        %1136 = vmatprep.mubr.bf16.mxu0 %v582
        %1137 = vmatmul.mubr.bf16.gmra.mxu0 %v581
        %v1138 = vpop.f32.mrf.mxu0
        %v1139 = vadd.f32 %v978, %v1138
        %v1140 = vpop.f32.mrf.mxu0
        %v1141 = vpop.f32.mrf.mxu0
        %v1142 = vadd.f32 %v981, %v1141
        %v1143 = vpop.f32.mrf.mxu0
        %1144 = vmatprep.mubr.bf16.mxu0 %v586
        %1145 = vmatmul.mubr.bf16.gmra.mxu0 %v585
        %v1146 = vpop.f32.mrf.mxu0
        %v1147 = vadd.f32 %v986, %v1146
        %v1148 = vpop.f32.mrf.mxu0
        %v1149 = vpop.f32.mrf.mxu0
        %v1150 = vadd.f32 %v989, %v1149
        %v1151 = vpop.f32.mrf.mxu0
        %1152 = vmatprep.mubr.bf16.mxu0 %v590
        %1153 = vmatmul.mubr.bf16.gmra.mxu0 %v589
        %v1154 = vpop.f32.mrf.mxu0
        %v1155 = vadd.f32 %v994, %v1154
        %v1156 = vpop.f32.mrf.mxu0
        %v1157 = vpop.f32.mrf.mxu0
        %v1158 = vadd.f32 %v997, %v1157
        %v1159 = vpop.f32.mrf.mxu0
        %1160 = vmatprep.mubr.bf16.mxu0 %v594
        %1161 = vmatmul.mubr.bf16.gmra.mxu0 %v593
        %v1162 = vpop.f32.mrf.mxu0
        %v1163 = vadd.f32 %v1002, %v1162
        %v1164 = vpop.f32.mrf.mxu0
        %v1165 = vpop.f32.mrf.mxu0
        %v1166 = vadd.f32 %v1005, %v1165
        %v1167 = vpop.f32.mrf.mxu0
        %1168 = vmatprep.mubr.bf16.mxu0 %v598
        %1169 = vmatmul.mubr.bf16.gmra.mxu0 %v597
        %v1170 = vpop.f32.mrf.mxu0
        %v1171 = vadd.f32 %v1010, %v1170
        %v1172 = vpop.f32.mrf.mxu0
        %v1173 = vpop.f32.mrf.mxu0
        %v1174 = vadd.f32 %v1013, %v1173
        %v1175 = vpop.f32.mrf.mxu0
        %1176 = vdwg.mxu0
        %v1177 = vtanh.pop %v1051
        %v1178 = vtanh.pop %v1054
        %v1179 = vtanh.pop %v1059
        %v1180 = vtanh.pop %v1062
        %v1181 = vtanh.pop %v1067
        %v1182 = vtanh.pop %v1070
        %v1183 = vtanh.pop %v1075
        %v1184 = vtanh.pop %v1078
        %v1185 = vtanh.pop %v1083
        %v1186 = vtanh.pop %v1086
        %v1187 = vtanh.pop %v1091
        %v1188 = vtanh.pop %v1094
        %v1189 = vtanh.pop %v1099
        %v1190 = vtanh.pop %v1102
        %v1191 = vtanh.pop %v1107
        %v1192 = vtanh.pop %v1110
        %v1193 = vtanh.pop %v1115
        %v1194 = vtanh.pop %v1118
        %v1195 = vtanh.pop %v1123
        %v1196 = vtanh.pop %v1126
        %v1197 = vtanh.pop %v1131
        %v1198 = vtanh.pop %v1134
        %v1199 = vtanh.pop %v1139
        %v1200 = vtanh.pop %v1142
        %v1201 = vtanh.pop %v1147
        %v1202 = vtanh.pop %v1150
        %v1203 = vtanh.pop %v1155
        %v1204 = vtanh.pop %v1158
        %v1205 = vtanh.pop %v1163
        %v1206 = vtanh.pop %v1166
        %v1207 = vtanh.pop %v1171
        %v1208 = vtanh.pop %v1174
        %1209 = vst [vmem:[%s204] sm:$0xff] %v1177
        %1210 = vst [vmem:[%s204 + $0x8] sm:$0xff] %v1178
        %1211 = vst [vmem:[%s204 + $0x10] sm:$0xff] %v1179
        %1212 = vst [vmem:[%s204 + $0x18] sm:$0xff] %v1180
        %1213 = vst [vmem:[%s204 + $0x20] sm:$0xff] %v1181
        %1214 = vst [vmem:[%s204 + $0x28] sm:$0xff] %v1182
        %1215 = vst [vmem:[%s204 + $0x30] sm:$0xff] %v1183
        %1216 = vst [vmem:[%s204 + $0x38] sm:$0xff] %v1184
        %1217 = vst [vmem:[%s204 + $0x40] sm:$0xff] %v1185
        %1218 = vst [vmem:[%s204 + $0x48] sm:$0xff] %v1186
        %1219 = vst [vmem:[%s204 + $0x50] sm:$0xff] %v1187
        %1220 = vst [vmem:[%s204 + $0x58] sm:$0xff] %v1188
        %1221 = vst [vmem:[%s204 + $0x60] sm:$0xff] %v1189
        %1222 = vst [vmem:[%s204 + $0x68] sm:$0xff] %v1190
        %1223 = vst [vmem:[%s204 + $0x70] sm:$0xff] %v1191
        %1224 = vst [vmem:[%s204 + $0x78] sm:$0xff] %v1192
        %1225 = vst [vmem:[%s204 + $0x80] sm:$0xff] %v1193
        %1226 = vst [vmem:[%s204 + $0x88] sm:$0xff] %v1194
        %1227 = vst [vmem:[%s204 + $0x90] sm:$0xff] %v1195
        %1228 = vst [vmem:[%s204 + $0x98] sm:$0xff] %v1196
        %1229 = vst [vmem:[%s204 + $0xa0] sm:$0xff] %v1197
        %1230 = vst [vmem:[%s204 + $0xa8] sm:$0xff] %v1198
        %1231 = vst [vmem:[%s204 + $0xb0] sm:$0xff] %v1199
        %1232 = vst [vmem:[%s204 + $0xb8] sm:$0xff] %v1200
        %1233 = vst [vmem:[%s204 + $0xc0] sm:$0xff] %v1201
        %1234 = vst [vmem:[%s204 + $0xc8] sm:$0xff] %v1202
        %1235 = vst [vmem:[%s204 + $0xd0] sm:$0xff] %v1203
        %1236 = vst [vmem:[%s204 + $0xd8] sm:$0xff] %v1204
        %1237 = vst [vmem:[%s204 + $0xe0] sm:$0xff] %v1205
        %1238 = vst [vmem:[%s204 + $0xe8] sm:$0xff] %v1206
        %1239 = vst [vmem:[%s204 + $0xf0] sm:$0xff] %v1207
        %1240 = vst [vmem:[%s204 + $0xf8] sm:$0xff] %v1208
        %s1241 = sand.u32 %s97, 1
        %s1242 = scalar_lea.sflag [#allocation4], %s1241
        %s1243 = sand.u32 %s97, 1
        %s1244 = smul.addr %s1243, 256
        %s1245 = scalar_lea.vmem [#allocation7], %s1244
        // Predicated region
        $region41: #{tpu_custom_call.1} parent=31 // pred_check
          %p1246 = pneg %p107
        $region42: #{tpu_custom_call.1} parent=31 // pred_check_branch
          %1248 = sbr.rel (%p1246) target = $region44
        $region43: #{tpu_custom_call.1} parent=31 // pred_region
          %s1249 = smul.u32 32, %s21
          %s1251 = ssub.s32 4096, 4096
          %1252 = vsyncadd %s1242, %s1251
          %s1253 = smul.addr %s1249, 128
          %s1254 = scalar_lea.hbm %s3, %s1253
          %s1255 = sshll.u32 %s1245, 4
          %s1256 = int_to_ptr.vmem [resolvable:$true] %s1255
          %1261 = dma.vmem_to_hbm [thread:$0]  %s1256, 4096, %s1254, %s1242, 128, 128, 8
        $region44: #{tpu_custom_call.1} parent=31 // pred_fallthru
          _
      $region32: #{tpu_custom_call.1} parent=5 // pred_fallthru
        _
      %p1262 = scmp.le.s32.totalorder 2, %s16
      // Predicated region
      $region45: #{tpu_custom_call.1} parent=5 // pred_check
        %p1263 = pneg %p1262
      $region46: #{tpu_custom_call.1} parent=5 // pred_check_branch
        %1265 = sbr.rel (%p1263) target = $region48
      $region47: #{tpu_custom_call.1} parent=5 // pred_region
        %s1266 = ssub.s32 %s16, 2
        // Predicated region
        $region49: #{tpu_custom_call.1} parent=47 // pred_check
          %p1267 = pneg %p113
        $region50: #{tpu_custom_call.1} parent=47 // pred_check_branch
          %1269 = sbr.rel (%p1267) target = $region52
        $region51: #{tpu_custom_call.1} parent=47 // pred_region
          %s1270 = sand.u32 %s98, 1
          %s1271 = scalar_lea.sflag [#allocation4], %s1270
          %s1272 = sand.u32 %s98, 1
          %s1273 = smul.addr %s1272, 256
          %s1274 = scalar_lea.vmem [#allocation7], %s1273
          %1275 = dma.done %s1271, 4096
        $region52: #{tpu_custom_call.1} parent=47 // pred_fallthru
          _
      $region48: #{tpu_custom_call.1} parent=5 // pred_fallthru
        _
    $region6: #{tpu_custom_call.1} parent=1 // loop_footer
      %s20 = sadd.s32 1, %s16
    $region7: #{tpu_custom_call.1} parent=1 // loop_footer_branch
      %15 = sbr.rel target = $region3
    $region8: #{tpu_custom_call.1} parent=1 // loop_exit
      _
    %1276 = vsyncpa [#allocation3], 1
    %s1277 = scalar_lea.sflag [#allocation3], 1
    %1278 = vsyncpa %s1277, 1
    %1279 = vsyncpa [#allocation6], 1
    %1280 = vsyncpa [#allocation4], 1
    %s1281 = scalar_lea.sflag [#allocation4], 1
    %1282 = vsyncpa %s1281, 1

</llo_original>
